<compile_context>
chip_gen: v7x
topology: tpu7x:2x2x1
jax: 0.10.0
libtpu: 0.0.40
codegen_flags: <defaults>
</compile_context>

<pallas_src>
import jax
import jax.numpy as jnp
from jax import lax
from jax.experimental import pallas as pl
from jax.experimental.pallas import tpu as pltpu

NA = 8                 # augmented/padded state dim: 6 real + 1 pad + constant 1
PACK = 16              # time steps packed per 128-lane row (16 * 8 = 128)
ROWS = 8               # rows per grid iteration -> one full (8,128) output tile
SUPER = PACK * ROWS    # 128 time steps per grid iteration
LANES = PACK * NA      # 128


# ----------------------------------------------------------------------------
# Pallas kernel: chunked affine recurrence via prefix-composed 8x8 maps
# ----------------------------------------------------------------------------
def rc_prefix_kernel(x0_ref, pref_ref, pfull_ref, out_ref, x_carry):
    # x0_ref   : (1, 8)        augmented initial state [x(6), 0, 1]
    # pref_ref : (8, 8, 128)   row j = [P_{16j} | P_{16j+1} | ... | P_{16j+15}]
    #                          (within-super-chunk prefix products, augmented)
    # pfull_ref: (1, 8, 8)     full super-chunk composite (carry-update matrix)
    # out_ref  : (8, 128)      packed augmented states for the 128 steps
    # x_carry  : (1, 8) VMEM scratch, persists across grid iterations
    @pl.when(pl.program_id(0) == 0)
    def _():
        x_carry[...] = x0_ref[...]

    x = x_carry[...]                                       # (1, 8)

    # 8 independent (1,8)@(8,128) matmuls: every row depends only on the
    # super-chunk-entry carry, so nothing is serialized inside the chunk.
    # Direct per-row lane-dense stores (no concat / sublane-pack epilogue).
    for j in range(ROWS):                                  # static unroll
        out_ref[j:j + 1, :] = jnp.dot(
            x, pref_ref[j], preferred_element_type=jnp.float32)

    # Serial carry across super-chunks: one tiny (1,8)@(8,8) matmul per
    # 128 integrated time steps.
    x_carry[...] = jnp.dot(x, pfull_ref[0],
                           preferred_element_type=jnp.float32)


def rc_integrate_pallas(A, B, iv, u_sub, dts):
    """A:(N,N)  B:(N,M)  iv:(N,1)  u_sub:(S,4,M)  dts:(S,) -> (S+1, N, 1)"""
    N = A.shape[0]
    S = int(dts.shape[0])
    T = S + 1

    # ---- exact affine collapse of the RK 3/8 step (linear, const-A ODE) ----
    # Phi(h) = I + hA + (hA)^2/2 + (hA)^3/6 + (hA)^4/24   (Horner form)
    h = dts[:, None, None]                                 # (S,1,1)
    hA = h * A[None, :, :]                                 # (S,N,N)
    I = jnp.eye(N, dtype=jnp.float32)
    P = I + hA / 4.0
    P = I + jnp.matmul(hA / 3.0, P)
    P = I + jnp.matmul(hA / 2.0, P)
    Phi = I + jnp.matmul(hA, P)                            # (S,N,N)

    # psi_n = staged RK-3/8 update evaluated at x = 0 (folds all B u terms).
    bu = jnp.einsum('sfm,nm->sfn', u_sub, B)               # (S,4,N)
    hN = dts[:, None]                                      # (S,1)
    k1 = bu[:, 0]
    k2 = (hN / 3.0) * jnp.einsum('sn,mn->sm', k1, A) + bu[:, 1]
    k3 = hN * jnp.einsum('sn,mn->sm', k2 - k1 / 3.0, A) + bu[:, 2]
    k4 = hN * jnp.einsum('sn,mn->sm', k1 - k2 + k3, A) + bu[:, 3]
    psi = (hN / 8.0) * (k1 + 3.0 * (k2 + k3) + k4)         # (S,N)

    # ---- augmented 8x8 per-step maps: y_{n+1} = y_n @ M_n,  y = [x, 0, 1] ---
    M = jnp.zeros((S, NA, NA), jnp.float32)
    M = M.at[:, :N, :N].set(jnp.swapaxes(Phi, -1, -2))     # Phi^T block
    M = M.at[:, NA - 1, :N].set(psi)                       # constant -> psi
    M = M.at[:, NA - 1, NA - 1].set(1.0)                   # keep constant 1

    # Pad the tail with IDENTITY maps so the carried state stays valid.
    n_super = pl.cdiv(S, SUPER)
    S_pad = n_super * SUPER
    eye8 = jnp.eye(NA, dtype=jnp.float32)
    M_pad = jnp.broadcast_to(eye8, (S_pad, NA, NA)).at[:S].set(M)

    # Within-super-chunk inclusive prefix products (log-depth 8x8 matmuls).
    M_r = M_pad.reshape(n_super, SUPER, NA, NA)
    Pfx = lax.associative_scan(jnp.matmul, M_r, axis=1)    # (n_super,128,8,8)

    # Pack 16 prefix matrices per 128-lane row:
    #   pref[c, j, a, 8i+b] = Pfx[c, 16j+i, a, b]
    pref = Pfx.reshape(n_super, ROWS, PACK, NA, NA)
    pref = jnp.transpose(pref, (0, 1, 3, 2, 4)).reshape(n_super * ROWS, NA, LANES)
    pfull = Pfx[:, SUPER - 1]                              # (n_super, 8, 8)

    # Augmented initial state [x0, 0, 1].
    x0 = jnp.zeros((1, NA), jnp.float32)
    x0 = x0.at[0, :N].set(iv[:, 0]).at[0, NA - 1].set(1.0)

    out = pl.pallas_call(
        rc_prefix_kernel,
        out_shape=jax.ShapeDtypeStruct((n_super * ROWS, LANES), jnp.float32),
        grid=(n_super,),
        in_specs=[
            pl.BlockSpec((1, NA), lambda c: (0, 0)),               # x0 (full)
            pl.BlockSpec((ROWS, NA, LANES), lambda c: (c, 0, 0)),  # prefix rows
            pl.BlockSpec((1, NA, NA), lambda c: (c, 0, 0)),        # carry matrix
        ],
        out_specs=pl.BlockSpec((ROWS, LANES), lambda c: (c, 0)),
        scratch_shapes=[pltpu.VMEM((1, NA), jnp.float32)],         # carried state
        compiler_params=pltpu.CompilerParams(
            dimension_semantics=("arbitrary",)),
    )(x0, pref, pfull)

    # Unpack: out[r, 8i+b] is step r*16+i, augmented lane b (first N = state).
    states = out.reshape(S_pad, NA)[:S, :N]
    traj = jnp.concatenate([iv[:, 0][None, :], states], axis=0)    # (T, N)
    return traj.reshape(T, N, 1)
    # TODO(synk): for very long trajectories on v7x, replace the serial carry
    # with a full log-depth associative scan over super-chunk composites to
    # use both TensorCores.


# ----------------------------------------------------------------------------
# Plain-JAX glue: synthetic "building", scaling, Tout, steady-state iv
# ----------------------------------------------------------------------------
def tout_continuous(t):
    # Continuous outside-temperature function (stands in for scipy interp1d).
    return 10.0 + 5.0 * jnp.sin(2.0 * jnp.pi * t / 3600.0)


def steady_state_iv(Re, temp_out, temp_in, n_rooms):
    # Mirrors steady_state_iv(): wall-node temps from series-resistance divider.
    I = (temp_out - temp_in) / jnp.sum(Re)
    v1 = temp_out - I * Re[0]
    v2 = v1 - I * Re[1]
    iv = jnp.concatenate(
        [jnp.stack([v1, v2]), jnp.full((n_rooms,), temp_in, jnp.float32)]
    ).reshape(-1, 1)
    return iv.astype(jnp.float32)


def build_building_matrices(theta_phys, n_rooms, surf_area):
    # Tout --Re0--|T1|--Re1--|T2|--Re2-- rooms ; Ce0, Ce1 wall caps, Cr room cap.
    Re = theta_phys[0:3]
    Ce = theta_phys[3:5]
    Cr = theta_phys[5]
    N = 2 + n_rooms
    M = 1 + n_rooms
    A = jnp.zeros((N, N), jnp.float32)
    A = A.at[0, 0].set(surf_area * (-1.0 / (Re[0] * Ce[0]) - 1.0 / (Re[1] * Ce[0])))
    A = A.at[0, 1].set(surf_area / (Re[1] * Ce[0]))
    A = A.at[1, 0].set(surf_area / (Re[1] * Ce[1]))
    A = A.at[1, 1].set(surf_area * (-1.0 / (Re[1] * Ce[1]) - 1.0 / (Re[2] * Ce[1])))
    for r in range(n_rooms):
        A = A.at[1, 2 + r].set(surf_area / (n_rooms * Re[2] * Ce[1]))
        A = A.at[2 + r, 1].set(surf_area / (n_rooms * Re[2] * Cr))
        A = A.at[2 + r, 2 + r].set(-surf_area / (n_rooms * Re[2] * Cr))
    B = jnp.zeros((N, M), jnp.float32)
    B = B.at[0, 0].set(surf_area / (Re[0] * Ce[0]))    # Tout drive
    for r in range(n_rooms):
        B = B.at[2 + r, 1 + r].set(1.0 / Cr)           # per-room heat input [W]
    return A, B


def rc_forward(params, loads, t_eval, action=0.0, n_rooms=4,
               surf_area=10.0, room_area=10.0):
    """Equivalent of RCModel.setup() + RCModel.forward(t_eval, action)."""
    # _build_matrices: transform (sigmoid) + physical scaling
    theta = jax.nn.sigmoid(params)
    lo = jnp.array([0.1, 0.1, 0.1, 1e4, 1e4, 1e3], jnp.float32)
    hi = jnp.array([5.0, 5.0, 5.0, 1e6, 1e6, 1e5], jnp.float32)
    theta_phys = lo + theta * (hi - lo)
    A, B = build_building_matrices(theta_phys, n_rooms, surf_area)

    # _build_loads: transform (sigmoid) + physical scaling (0..50 W/m^2)
    loads_phys = jax.nn.sigmoid(loads) * 50.0
    cool_load, gain_load = loads_phys[0], loads_phys[1]

    # f_ode heat input (constant over the run, as in the reference model)
    Q_area = -cool_load * action + gain_load
    Q_watts = Q_area * room_area                      # proportional_heating

    # forward(): time handling
    t_eval = t_eval.reshape(-1).astype(jnp.float32)
    t0 = t_eval[0]
    ts = t_eval - t0
    dts = ts[1:] - ts[:-1]                            # (S,)
    S = dts.shape[0]

    # RK 3/8-rule sub-times; Tout evaluated at absolute time (t + t0)
    sub = jnp.stack([ts[:-1],
                     ts[:-1] + dts / 3.0,
                     ts[:-1] + 2.0 * dts / 3.0,
                     ts[1:]], axis=1)                 # (S, 4)
    Tout_sub = tout_continuous(sub + t0)

    M = 1 + n_rooms
    u_sub = jnp.zeros((S, 4, M), jnp.float32)
    u_sub = u_sub.at[:, :, 0].set(Tout_sub)
    u_sub = u_sub.at[:, :, 1:].set(jnp.broadcast_to(Q_watts, (S, 4, n_rooms)))

    # initial value (steady-state, as in get_iv_array/steady_state_iv)
    iv = steady_state_iv(theta_phys[0:3], tout_continuous(t0),
                         jnp.float32(21.0), n_rooms)

    return rc_integrate_pallas(A, B, iv, u_sub, dts), (A, B, iv, u_sub, dts)


# ----------------------------------------------------------------------------
# Pure-JAX reference: staged RK4 (3/8 rule), exactly torchdiffeq semantics
# ----------------------------------------------------------------------------
def ref_integrate(A, B, iv, u_sub, dts):
    x0 = iv[:, 0]

    def step(x, inp):
        u4, dt = inp
        bu = u4 @ B.T

        def f(y, s):
            return y @ A.T + bu[s]

        k1 = f(x, 0)
        k2 = f(x + dt / 3.0 * k1, 1)
        k3 = f(x + dt * (k2 - k1 / 3.0), 2)
        k4 = f(x + dt * (k1 - k2 + k3), 3)
        xn = x + dt * 0.125 * (k1 + 3.0 * (k2 + k3) + k4)
        return xn, xn

    _, ys = lax.scan(step, x0, (u_sub, dts))
    return jnp.concatenate([x0[None], ys], axis=0)[..., None]


if __name__ == "__main__":
    n_rooms = 4
    n_params = 6          # Re0, Re1, Re2, Ce0, Ce1, Cr

    key = jax.random.PRNGKey(0)
    kp, kl = jax.random.split(key)
    # initialise_parameters(): uniform draws (logit+sigmoid cancel, so keep raw)
    params = jax.random.uniform(kp, (n_params,), jnp.float32)
    loads = jax.random.uniform(kl, (2, n_rooms), jnp.float32)

    # 16 time points, 30 s apart, non-zero t0 to exercise the t0 shift
    t_eval = (jnp.arange(16, dtype=jnp.float32) * 30.0 + 600.0)

    out, (A, B, iv, u_sub, dts) = rc_forward(params, loads, t_eval,
                                             action=0.0, n_rooms=n_rooms)
    out = jax.block_until_ready(out)
    assert out.shape == (t_eval.shape[0], 2 + n_rooms, 1)

    ref = jax.block_until_ready(ref_integrate(A, B, iv, u_sub, dts))
    # Prefix-composed affine maps differ from the staged form only by f32 rounding.
    assert jnp.allclose(out, ref, rtol=1e-4, atol=1e-3), "mismatch vs JAX reference"

    # TODO(synk): cooling_policy / record_action bookkeeping and the dataset-driven
    # get_iv_array path (scipy interp1d over measured data) are host-side Python in
    # the original module and are not translated.
    print("KERNEL_OK")
</pallas_src>

<mosaic_0001>
module attributes {stable_mosaic.version = 11 : i64} {
  func.func @rc_prefix_kernel(%arg0: i32, %arg1: memref<1x8xf32, #tpu.memory_space<vmem>>, %arg2: memref<8x8x128xf32, #tpu.memory_space<vmem>>, %arg3: memref<1x8x8xf32, #tpu.memory_space<vmem>>, %arg4: memref<8x128xf32, #tpu.memory_space<vmem>>, %arg5: memref<1x8xf32, #tpu.memory_space<vmem>>) attributes {dimension_semantics = [#tpu.dimension_semantics<arbitrary>], iteration_bounds = array<i64: 1>, scalar_prefetch = 0 : i64, scratch_operands = 1 : i64, tpu.core_type = #tpu.core_type<tc>, window_params = [{pipeline_mode = #tpu.pipeline_mode<synchronous>, transform_indices = @transform_0, window_bounds = array<i64: 1, 8>}, {transform_indices = @transform_1, window_bounds = array<i64: 8, 8, 128>}, {transform_indices = @transform_2, window_bounds = array<i64: 1, 8, 8>}, {transform_indices = @transform_3, window_bounds = array<i64: 8, 128>}]} {
    %c0_i32 = arith.constant 0 : i32
    %0 = arith.cmpi eq, %arg0, %c0_i32 : i32
    %1 = arith.extui %0 : i1 to i32
    %c0_i32_0 = arith.constant 0 : i32
    %2 = arith.cmpi ne, %1, %c0_i32_0 : i32
    scf.if %2 {
      %c0_48 = arith.constant 0 : index
      %c0_49 = arith.constant 0 : index
      %40 = vector.load %arg1[%c0_48, %c0_49] : memref<1x8xf32, #tpu.memory_space<vmem>>, vector<1x8xf32>
      %c0_50 = arith.constant 0 : index
      %c0_51 = arith.constant 0 : index
      %41 = vector.load %arg5[%c0_50, %c0_51] : memref<1x8xf32, #tpu.memory_space<vmem>>, vector<1x8xf32>
      tpu.vector_store %arg5[%c0_50, %c0_51], %40 {strides = array<i32>} : memref<1x8xf32, #tpu.memory_space<vmem>>, vector<1x8xf32>,
    } else {
    }
    %c0 = arith.constant 0 : index
    %c0_1 = arith.constant 0 : index
    %3 = vector.load %arg5[%c0, %c0_1] : memref<1x8xf32, #tpu.memory_space<vmem>>, vector<1x8xf32>
    %c0_2 = arith.constant 0 : index
    %c0_3 = arith.constant 0 : index
    %c0_4 = arith.constant 0 : index
    %4 = vector.load %arg2[%c0_2, %c0_3, %c0_4] : memref<8x8x128xf32, #tpu.memory_space<vmem>>, vector<1x8x128xf32>
    %5 = vector.shape_cast %4 : vector<1x8x128xf32> to vector<8x128xf32>
    %cst = arith.constant dense<0.000000e+00> : vector<1x128xf32>
    %6 = tpu.matmul %3, %5, %cst {dimension_numbers = #tpu.dot_dimension_numbers<[1], [0], [0], [1], [0, 0, 1, 1], [], []>} : vector<1x8xf32>, vector<8x128xf32>, vector<1x128xf32> -> vector<1x128xf32>
    %c0_5 = arith.constant 0 : index
    %c0_6 = arith.constant 0 : index
    %7 = vector.load %arg4[%c0_5, %c0_6] : memref<8x128xf32, #tpu.memory_space<vmem>>, vector<1x128xf32>
    tpu.vector_store %arg4[%c0_5, %c0_6], %6 {strides = array<i32>} : memref<8x128xf32, #tpu.memory_space<vmem>>, vector<1x128xf32>,
    %c1 = arith.constant 1 : index
    %c0_7 = arith.constant 0 : index
    %c0_8 = arith.constant 0 : index
    %8 = vector.load %arg2[%c1, %c0_7, %c0_8] : memref<8x8x128xf32, #tpu.memory_space<vmem>>, vector<1x8x128xf32>
    %9 = vector.shape_cast %8 : vector<1x8x128xf32> to vector<8x128xf32>
    %cst_9 = arith.constant dense<0.000000e+00> : vector<1x128xf32>
    %10 = tpu.matmul %3, %9, %cst_9 {dimension_numbers = #tpu.dot_dimension_numbers<[1], [0], [0], [1], [0, 0, 1, 1], [], []>} : vector<1x8xf32>, vector<8x128xf32>, vector<1x128xf32> -> vector<1x128xf32>
    %c1_10 = arith.constant 1 : index
    %c0_11 = arith.constant 0 : index
    %11 = vector.load %arg4[%c1_10, %c0_11] : memref<8x128xf32, #tpu.memory_space<vmem>>, vector<1x128xf32>
    tpu.vector_store %arg4[%c1_10, %c0_11], %10 {strides = array<i32>} : memref<8x128xf32, #tpu.memory_space<vmem>>, vector<1x128xf32>,
    %c2 = arith.constant 2 : index
    %c0_12 = arith.constant 0 : index
    %c0_13 = arith.constant 0 : index
    %12 = vector.load %arg2[%c2, %c0_12, %c0_13] : memref<8x8x128xf32, #tpu.memory_space<vmem>>, vector<1x8x128xf32>
    %13 = vector.shape_cast %12 : vector<1x8x128xf32> to vector<8x128xf32>
    %cst_14 = arith.constant dense<0.000000e+00> : vector<1x128xf32>
    %14 = tpu.matmul %3, %13, %cst_14 {dimension_numbers = #tpu.dot_dimension_numbers<[1], [0], [0], [1], [0, 0, 1, 1], [], []>} : vector<1x8xf32>, vector<8x128xf32>, vector<1x128xf32> -> vector<1x128xf32>
    %c2_15 = arith.constant 2 : index
    %c0_16 = arith.constant 0 : index
    %15 = vector.load %arg4[%c2_15, %c0_16] : memref<8x128xf32, #tpu.memory_space<vmem>>, vector<1x128xf32>
    tpu.vector_store %arg4[%c2_15, %c0_16], %14 {strides = array<i32>} : memref<8x128xf32, #tpu.memory_space<vmem>>, vector<1x128xf32>,
    %c3 = arith.constant 3 : index
    %c0_17 = arith.constant 0 : index
    %c0_18 = arith.constant 0 : index
    %16 = vector.load %arg2[%c3, %c0_17, %c0_18] : memref<8x8x128xf32, #tpu.memory_space<vmem>>, vector<1x8x128xf32>
    %17 = vector.shape_cast %16 : vector<1x8x128xf32> to vector<8x128xf32>
    %cst_19 = arith.constant dense<0.000000e+00> : vector<1x128xf32>
    %18 = tpu.matmul %3, %17, %cst_19 {dimension_numbers = #tpu.dot_dimension_numbers<[1], [0], [0], [1], [0, 0, 1, 1], [], []>} : vector<1x8xf32>, vector<8x128xf32>, vector<1x128xf32> -> vector<1x128xf32>
    %c3_20 = arith.constant 3 : index
    %c0_21 = arith.constant 0 : index
    %19 = vector.load %arg4[%c3_20, %c0_21] : memref<8x128xf32, #tpu.memory_space<vmem>>, vector<1x128xf32>
    tpu.vector_store %arg4[%c3_20, %c0_21], %18 {strides = array<i32>} : memref<8x128xf32, #tpu.memory_space<vmem>>, vector<1x128xf32>,
    %c4 = arith.constant 4 : index
    %c0_22 = arith.constant 0 : index
    %c0_23 = arith.constant 0 : index
    %20 = vector.load %arg2[%c4, %c0_22, %c0_23] : memref<8x8x128xf32, #tpu.memory_space<vmem>>, vector<1x8x128xf32>
    %21 = vector.shape_cast %20 : vector<1x8x128xf32> to vector<8x128xf32>
    %cst_24 = arith.constant dense<0.000000e+00> : vector<1x128xf32>
    %22 = tpu.matmul %3, %21, %cst_24 {dimension_numbers = #tpu.dot_dimension_numbers<[1], [0], [0], [1], [0, 0, 1, 1], [], []>} : vector<1x8xf32>, vector<8x128xf32>, vector<1x128xf32> -> vector<1x128xf32>
    %c4_25 = arith.constant 4 : index
    %c0_26 = arith.constant 0 : index
    %23 = vector.load %arg4[%c4_25, %c0_26] : memref<8x128xf32, #tpu.memory_space<vmem>>, vector<1x128xf32>
    tpu.vector_store %arg4[%c4_25, %c0_26], %22 {strides = array<i32>} : memref<8x128xf32, #tpu.memory_space<vmem>>, vector<1x128xf32>,
    %c5 = arith.constant 5 : index
    %c0_27 = arith.constant 0 : index
    %c0_28 = arith.constant 0 : index
    %24 = vector.load %arg2[%c5, %c0_27, %c0_28] : memref<8x8x128xf32, #tpu.memory_space<vmem>>, vector<1x8x128xf32>
    %25 = vector.shape_cast %24 : vector<1x8x128xf32> to vector<8x128xf32>
    %cst_29 = arith.constant dense<0.000000e+00> : vector<1x128xf32>
    %26 = tpu.matmul %3, %25, %cst_29 {dimension_numbers = #tpu.dot_dimension_numbers<[1], [0], [0], [1], [0, 0, 1, 1], [], []>} : vector<1x8xf32>, vector<8x128xf32>, vector<1x128xf32> -> vector<1x128xf32>
    %c5_30 = arith.constant 5 : index
    %c0_31 = arith.constant 0 : index
    %27 = vector.load %arg4[%c5_30, %c0_31] : memref<8x128xf32, #tpu.memory_space<vmem>>, vector<1x128xf32>
    tpu.vector_store %arg4[%c5_30, %c0_31], %26 {strides = array<i32>} : memref<8x128xf32, #tpu.memory_space<vmem>>, vector<1x128xf32>,
    %c6 = arith.constant 6 : index
    %c0_32 = arith.constant 0 : index
    %c0_33 = arith.constant 0 : index
    %28 = vector.load %arg2[%c6, %c0_32, %c0_33] : memref<8x8x128xf32, #tpu.memory_space<vmem>>, vector<1x8x128xf32>
    %29 = vector.shape_cast %28 : vector<1x8x128xf32> to vector<8x128xf32>
    %cst_34 = arith.constant dense<0.000000e+00> : vector<1x128xf32>
    %30 = tpu.matmul %3, %29, %cst_34 {dimension_numbers = #tpu.dot_dimension_numbers<[1], [0], [0], [1], [0, 0, 1, 1], [], []>} : vector<1x8xf32>, vector<8x128xf32>, vector<1x128xf32> -> vector<1x128xf32>
    %c6_35 = arith.constant 6 : index
    %c0_36 = arith.constant 0 : index
    %31 = vector.load %arg4[%c6_35, %c0_36] : memref<8x128xf32, #tpu.memory_space<vmem>>, vector<1x128xf32>
    tpu.vector_store %arg4[%c6_35, %c0_36], %30 {strides = array<i32>} : memref<8x128xf32, #tpu.memory_space<vmem>>, vector<1x128xf32>,
    %c7 = arith.constant 7 : index
    %c0_37 = arith.constant 0 : index
    %c0_38 = arith.constant 0 : index
    %32 = vector.load %arg2[%c7, %c0_37, %c0_38] : memref<8x8x128xf32, #tpu.memory_space<vmem>>, vector<1x8x128xf32>
    %33 = vector.shape_cast %32 : vector<1x8x128xf32> to vector<8x128xf32>
    %cst_39 = arith.constant dense<0.000000e+00> : vector<1x128xf32>
    %34 = tpu.matmul %3, %33, %cst_39 {dimension_numbers = #tpu.dot_dimension_numbers<[1], [0], [0], [1], [0, 0, 1, 1], [], []>} : vector<1x8xf32>, vector<8x128xf32>, vector<1x128xf32> -> vector<1x128xf32>
    %c7_40 = arith.constant 7 : index
    %c0_41 = arith.constant 0 : index
    %35 = vector.load %arg4[%c7_40, %c0_41] : memref<8x128xf32, #tpu.memory_space<vmem>>, vector<1x128xf32>
    tpu.vector_store %arg4[%c7_40, %c0_41], %34 {strides = array<i32>} : memref<8x128xf32, #tpu.memory_space<vmem>>, vector<1x128xf32>,
    %c0_42 = arith.constant 0 : index
    %c0_43 = arith.constant 0 : index
    %c0_44 = arith.constant 0 : index
    %36 = vector.load %arg3[%c0_42, %c0_43, %c0_44] : memref<1x8x8xf32, #tpu.memory_space<vmem>>, vector<1x8x8xf32>
    %37 = vector.shape_cast %36 : vector<1x8x8xf32> to vector<8x8xf32>
    %cst_45 = arith.constant dense<0.000000e+00> : vector<1x8xf32>
    %38 = tpu.matmul %3, %37, %cst_45 {dimension_numbers = #tpu.dot_dimension_numbers<[1], [0], [0], [1], [0, 0, 1, 1], [], []>} : vector<1x8xf32>, vector<8x8xf32>, vector<1x8xf32> -> vector<1x8xf32>
    %c0_46 = arith.constant 0 : index
    %c0_47 = arith.constant 0 : index
    %39 = vector.load %arg5[%c0_46, %c0_47] : memref<1x8xf32, #tpu.memory_space<vmem>>, vector<1x8xf32>
    tpu.vector_store %arg5[%c0_46, %c0_47], %38 {strides = array<i32>} : memref<1x8xf32, #tpu.memory_space<vmem>>, vector<1x8xf32>,
    return
  }
  func.func @transform_0(%arg0: i32) -> (i32, i32) {
    %c0_i32 = arith.constant 0 : i32
    %c0_i32_0 = arith.constant 0 : i32
    %c0_i32_1 = arith.constant 0 : i32
    return %c0_i32, %c0_i32_0 : i32, i32
  }
  func.func @transform_1(%arg0: i32) -> (i32, i32, i32) {
    %c0_i32 = arith.constant 0 : i32
    %c0_i32_0 = arith.constant 0 : i32
    %c0_i32_1 = arith.constant 0 : i32
    return %arg0, %c0_i32, %c0_i32_0 : i32, i32, i32
  }
  func.func @transform_2(%arg0: i32) -> (i32, i32, i32) {
    %c0_i32 = arith.constant 0 : i32
    %c0_i32_0 = arith.constant 0 : i32
    %c0_i32_1 = arith.constant 0 : i32
    return %arg0, %c0_i32, %c0_i32_0 : i32, i32, i32
  }
  func.func @transform_3(%arg0: i32) -> (i32, i32) {
    %c0_i32 = arith.constant 0 : i32
    %c0_i32_0 = arith.constant 0 : i32
    return %arg0, %c0_i32 : i32, i32
  }
}

</mosaic_0001>

<llo_original>
// kernel: tpu_custom_call.1
$region0: #{tpu_custom_call.1}
  #allocation0 [shape = 'u32[]', space=smem, size = 0x4, offset = 0x4, fixed_abs, tag = 'smem constant byte address 0x4 - core index']
  #allocation1 [shape = 'u32[144,128]{1,0:T(1,128)}', space=vmem, size = 0x12000, scoped, tag = 'internal scratch']
  #allocation2 [shape = 'f32[1,8]{1,0:T(1,128)}', space=vmem, size = 0x200, scoped, tag = 'scratch operand']
  %s0 = inlined_call_operand.hbm [shape: f32[1,8], index: 0, kind: input, shape index: {}]
  %s1 = inlined_call_operand.hbm [shape: f32[8,8,128], index: 1, kind: input, shape index: {}]
  %s2 = inlined_call_operand.hbm [shape: f32[1,8,8], index: 2, kind: input, shape index: {}]
  %s3 = inlined_call_operand.hbm [shape: f32[8,128], index: 3, kind: output, shape index: {}]
  %s4 = sld [smem:[#allocation0]]
  $region38: #{tpu_custom_call.1} parent=0
    _
  %s6 = ssub.s32 1, %s4
  %s7 = scalar_select 0, %s6, %s4
  $region1: #{tpu_custom_call.1} parent=0
    #allocation3 [shape = 'u8[512]{0}', space=vmem, size = 0x400, scoped, tag = 'input window, operand 0, single buffered']
    #allocation4 [shape = 's32[1]{0}', space=sflag, size = 0x4, scoped, tag = 'scoped memory for tpu_custom_call.1']
    #allocation5 [shape = 's32[1]{0}', space=sflag, size = 0x4, scoped, tag = 'scoped memory for tpu_custom_call.1']
    #allocation6 [shape = 'u8[32768]{0}', space=vmem, size = 0x8000, scoped, tag = 'input window, operand 1, single buffered']
    #allocation7 [shape = 's32[1]{0}', space=sflag, size = 0x4, scoped, tag = 'scoped memory for tpu_custom_call.1']
    #allocation8 [shape = 'u8[4096]{0}', space=vmem, size = 0x1000, scoped, tag = 'input window, operand 2, single buffered']
    #allocation9 [shape = 'u8[4096]{0}', space=vmem, size = 0x1000, scoped, tag = 'output window, operand 0, single buffered']
    %8 = vsyncpa [#allocation4], 0
    %9 = vsyncpa [#allocation7], 0
    %10 = vsyncpa [#allocation5], 0
    // Predicated region
    $region2: #{tpu_custom_call.1} parent=1 // pred_check
      _
    $region3: #{tpu_custom_call.1} parent=1 // pred_check_branch
      %12 = sbr.rel (0) target = $region5
    $region4: #{tpu_custom_call.1} parent=1 // pred_region
      %s14 = ssub.s32 16, 16
      %15 = vsyncadd [#allocation4], %s14
      %s17 = sshll.u32 [#allocation3], 4
      %s18 = int_to_ptr.vmem [resolvable:$true] %s17
      %20 = dma.hbm_to_vmem [thread:$0]  %s0, 16, %s18, [#allocation4]
    $region5: #{tpu_custom_call.1} parent=1 // pred_fallthru
      _
    // Predicated region
    $region6: #{tpu_custom_call.1} parent=1 // pred_check
      _
    $region7: #{tpu_custom_call.1} parent=1 // pred_check_branch
      %22 = sbr.rel (0) target = $region9
    $region8: #{tpu_custom_call.1} parent=1 // pred_region
      %s24 = ssub.s32 1024, 1024
      %25 = vsyncadd [#allocation7], %s24
      %s26 = sshll.u32 [#allocation6], 4
      %s27 = int_to_ptr.vmem [resolvable:$true] %s26
      %32 = dma.hbm_to_vmem [thread:$0]  %s1, 1024, %s27, [#allocation7], 128, 128, 8
    $region9: #{tpu_custom_call.1} parent=1 // pred_fallthru
      _
    // Predicated region
    $region10: #{tpu_custom_call.1} parent=1 // pred_check
      _
    $region11: #{tpu_custom_call.1} parent=1 // pred_check_branch
      %34 = sbr.rel (0) target = $region13
    $region12: #{tpu_custom_call.1} parent=1 // pred_region
      %s36 = ssub.s32 128, 128
      %37 = vsyncadd [#allocation7], %s36
      %s39 = sshll.u32 [#allocation8], 4
      %s40 = int_to_ptr.vmem [resolvable:$true] %s39
      %42 = dma.hbm_to_vmem [thread:$0]  %s2, 128, %s40, [#allocation7]
    $region13: #{tpu_custom_call.1} parent=1 // pred_fallthru
      _
    // Predicated region
    $region14: #{tpu_custom_call.1} parent=1 // pred_check
      _
    $region15: #{tpu_custom_call.1} parent=1 // pred_check_branch
      %44 = sbr.rel (0) target = $region17
    $region16: #{tpu_custom_call.1} parent=1 // pred_region
      %45 = dma.done [#allocation4], 16
    $region17: #{tpu_custom_call.1} parent=1 // pred_fallthru
      _
    // Predicated region
    $region18: #{tpu_custom_call.1} parent=1 // pred_check
      _
    $region19: #{tpu_custom_call.1} parent=1 // pred_check_branch
      %47 = sbr.rel (0) target = $region21
    $region20: #{tpu_custom_call.1} parent=1 // pred_region
      %48 = dma.done [#allocation7], 1024
    $region21: #{tpu_custom_call.1} parent=1 // pred_fallthru
      _
    // Predicated region
    $region22: #{tpu_custom_call.1} parent=1 // pred_check
      _
    $region23: #{tpu_custom_call.1} parent=1 // pred_check_branch
      %50 = sbr.rel (0) target = $region25
    $region24: #{tpu_custom_call.1} parent=1 // pred_region
      %51 = dma.done [#allocation7], 128
    $region25: #{tpu_custom_call.1} parent=1 // pred_fallthru
      _
    %p52 = scmp.eq.s32.totalorder 0, 0
    // Predicated region
    $region26: #{tpu_custom_call.1} parent=1 // pred_check
      %p53 = pneg %p52
    $region27: #{tpu_custom_call.1} parent=1 // pred_check_branch
      %55 = sbr.rel (%p53) target = $region29
    $region28: #{tpu_custom_call.1} parent=1 // pred_region
      %v56 = vld [vmem:[#allocation3] sm:$0x1]
      %vm57 = vcmask 57344
      %58 = vst.msk [vmem:[#allocation2] sm:$0x1] %vm57, %v56
    $region29: #{tpu_custom_call.1} parent=1 // pred_fallthru
      _
    %v59 = vld [vmem:[#allocation2] sm:$0x1]
    %v60 = vld [vmem:[#allocation6] sm:$0xff]
    %vm61 = vcmask 64512
    %v63 = vsel %vm61, %v59, 0
    %65 = vmatprep.subr.mxu0 0.0
    %66 = vmatpush1.msra.mxu0 %v60
    %67 = vmatprep.subr.mxu0 0.0
    %68 = vmatpush1.msra.mxu0 0.0
    %69 = vmatprep.subr.mxu0 0.0
    %70 = vmatpush1.msra.mxu0 0.0
    %71 = vmatprep.subr.mxu0 0.0
    %72 = vmatpush1.msra.mxu0 0.0
    %73 = vmatprep.subr.mxu0 0.0
    %74 = vmatpush1.msra.mxu0 0.0
    %75 = vmatprep.subr.mxu0 0.0
    %76 = vmatpush1.msra.mxu0 0.0
    %77 = vmatprep.subr.mxu0 0.0
    %78 = vmatpush1.msra.mxu0 0.0
    %79 = vmatprep.subr.mxu0 0.0
    %80 = vmatpush1.msra.mxu0 0.0
    %81 = vmatprep.subr.mxu0 0.0
    %82 = vmatpush1.msra.mxu0 0.0
    %83 = vmatprep.subr.mxu0 0.0
    %84 = vmatpush1.msra.mxu0 0.0
    %85 = vmatprep.subr.mxu0 0.0
    %86 = vmatpush1.msra.mxu0 0.0
    %87 = vmatprep.subr.mxu0 0.0
    %88 = vmatpush1.msra.mxu0 0.0
    %89 = vmatprep.subr.mxu0 0.0
    %90 = vmatpush1.msra.mxu0 0.0
    %91 = vmatprep.subr.mxu0 0.0
    %92 = vmatpush1.msra.mxu0 0.0
    %93 = vmatprep.subr.mxu0 0.0
    %94 = vmatpush1.msra.mxu0 0.0
    %95 = vmatprep.subr.mxu0 0.0
    %96 = vmatpush1.msra.mxu0 0.0
    %97 = vmatprep.subr.mxu0 0.0
    %98 = vmatpush1.msra.mxu0 0.0
    %99 = vmatprep.subr.mxu0 0.0
    %100 = vmatpush1.msra.mxu0 0.0
    %101 = vmatprep.subr.mxu0 0.0
    %102 = vmatpush1.msra.mxu0 0.0
    %103 = vmatprep.subr.mxu0 0.0
    %104 = vmatpush1.msra.mxu0 0.0
    %105 = vmatprep.subr.mxu0 0.0
    %106 = vmatpush1.msra.mxu0 0.0
    %107 = vmatprep.subr.mxu0 0.0
    %108 = vmatpush1.msra.mxu0 0.0
    %109 = vmatprep.subr.mxu0 0.0
    %110 = vmatpush1.msra.mxu0 0.0
    %111 = vmatprep.subr.mxu0 0.0
    %112 = vmatpush1.msra.mxu0 0.0
    %113 = vmatprep.subr.mxu0 0.0
    %114 = vmatpush1.msra.mxu0 0.0
    %115 = vmatprep.subr.mxu0 0.0
    %116 = vmatpush1.msra.mxu0 0.0
    %117 = vmatprep.subr.mxu0 0.0
    %118 = vmatpush1.msra.mxu0 0.0
    %119 = vmatprep.subr.mxu0 0.0
    %120 = vmatpush1.msra.mxu0 0.0
    %121 = vmatprep.subr.mxu0 0.0
    %122 = vmatpush1.msra.mxu0 0.0
    %123 = vmatprep.subr.mxu0 0.0
    %124 = vmatpush1.msra.mxu0 0.0
    %125 = vmatprep.subr.mxu0 0.0
    %126 = vmatpush1.msra.mxu0 0.0
    %127 = vmatprep.subr.mxu0 0.0
    %128 = vmatpush1.msra.mxu0 0.0
    %129 = vmatprep.mubr.f32.mxu0 0.0
    %130 = vmatmul.mubr.f32.gmra.mrb[0].mxu0 %v63
    %v131 = vpop.f32.mrb[0].mxu0
    %v132 = vadd.f32 0.0, %v131
    %v133 = vpop.f32.mrb[0].mxu0
    %134 = vdwg.mxu0
    %135 = vst [vmem:[#allocation9] sm:$0x1] %v132
    %s136 = scalar_lea.vmem [#allocation6], 8
    %v137 = vld [vmem:[%s136] sm:$0xff]
    %138 = vmatprep.subr.mxu0 0.0
    %139 = vmatpush1.msra.mxu0 %v137
    %140 = vmatprep.subr.mxu0 0.0
    %141 = vmatpush1.msra.mxu0 0.0
    %142 = vmatprep.subr.mxu0 0.0
    %143 = vmatpush1.msra.mxu0 0.0
    %144 = vmatprep.subr.mxu0 0.0
    %145 = vmatpush1.msra.mxu0 0.0
    %146 = vmatprep.subr.mxu0 0.0
    %147 = vmatpush1.msra.mxu0 0.0
    %148 = vmatprep.subr.mxu0 0.0
    %149 = vmatpush1.msra.mxu0 0.0
    %150 = vmatprep.subr.mxu0 0.0
    %151 = vmatpush1.msra.mxu0 0.0
    %152 = vmatprep.subr.mxu0 0.0
    %153 = vmatpush1.msra.mxu0 0.0
    %154 = vmatprep.subr.mxu0 0.0
    %155 = vmatpush1.msra.mxu0 0.0
    %156 = vmatprep.subr.mxu0 0.0
    %157 = vmatpush1.msra.mxu0 0.0
    %158 = vmatprep.subr.mxu0 0.0
    %159 = vmatpush1.msra.mxu0 0.0
    %160 = vmatprep.subr.mxu0 0.0
    %161 = vmatpush1.msra.mxu0 0.0
    %162 = vmatprep.subr.mxu0 0.0
    %163 = vmatpush1.msra.mxu0 0.0
    %164 = vmatprep.subr.mxu0 0.0
    %165 = vmatpush1.msra.mxu0 0.0
    %166 = vmatprep.subr.mxu0 0.0
    %167 = vmatpush1.msra.mxu0 0.0
    %168 = vmatprep.subr.mxu0 0.0
    %169 = vmatpush1.msra.mxu0 0.0
    %170 = vmatprep.subr.mxu0 0.0
    %171 = vmatpush1.msra.mxu0 0.0
    %172 = vmatprep.subr.mxu0 0.0
    %173 = vmatpush1.msra.mxu0 0.0
    %174 = vmatprep.subr.mxu0 0.0
    %175 = vmatpush1.msra.mxu0 0.0
    %176 = vmatprep.subr.mxu0 0.0
    %177 = vmatpush1.msra.mxu0 0.0
    %178 = vmatprep.subr.mxu0 0.0
    %179 = vmatpush1.msra.mxu0 0.0
    %180 = vmatprep.subr.mxu0 0.0
    %181 = vmatpush1.msra.mxu0 0.0
    %182 = vmatprep.subr.mxu0 0.0
    %183 = vmatpush1.msra.mxu0 0.0
    %184 = vmatprep.subr.mxu0 0.0
    %185 = vmatpush1.msra.mxu0 0.0
    %186 = vmatprep.subr.mxu0 0.0
    %187 = vmatpush1.msra.mxu0 0.0
    %188 = vmatprep.subr.mxu0 0.0
    %189 = vmatpush1.msra.mxu0 0.0
    %190 = vmatprep.subr.mxu0 0.0
    %191 = vmatpush1.msra.mxu0 0.0
    %192 = vmatprep.subr.mxu0 0.0
    %193 = vmatpush1.msra.mxu0 0.0
    %194 = vmatprep.subr.mxu0 0.0
    %195 = vmatpush1.msra.mxu0 0.0
    %196 = vmatprep.subr.mxu0 0.0
    %197 = vmatpush1.msra.mxu0 0.0
    %198 = vmatprep.subr.mxu0 0.0
    %199 = vmatpush1.msra.mxu0 0.0
    %200 = vmatprep.subr.mxu0 0.0
    %201 = vmatpush1.msra.mxu0 0.0
    %202 = vmatprep.mubr.f32.mxu0 0.0
    %203 = vmatmul.mubr.f32.gmra.mrb[0].mxu0 %v63
    %v204 = vpop.f32.mrb[0].mxu0
    %v205 = vadd.f32 0.0, %v204
    %v206 = vpop.f32.mrb[0].mxu0
    %207 = vdwg.mxu0
    %208 = vst [vmem:[#allocation9 + $0x1] sm:$0x1] %v205
    %s209 = scalar_lea.vmem [#allocation6], 16
    %v210 = vld [vmem:[%s209] sm:$0xff]
    %211 = vmatprep.subr.mxu0 0.0
    %212 = vmatpush1.msra.mxu0 %v210
    %213 = vmatprep.subr.mxu0 0.0
    %214 = vmatpush1.msra.mxu0 0.0
    %215 = vmatprep.subr.mxu0 0.0
    %216 = vmatpush1.msra.mxu0 0.0
    %217 = vmatprep.subr.mxu0 0.0
    %218 = vmatpush1.msra.mxu0 0.0
    %219 = vmatprep.subr.mxu0 0.0
    %220 = vmatpush1.msra.mxu0 0.0
    %221 = vmatprep.subr.mxu0 0.0
    %222 = vmatpush1.msra.mxu0 0.0
    %223 = vmatprep.subr.mxu0 0.0
    %224 = vmatpush1.msra.mxu0 0.0
    %225 = vmatprep.subr.mxu0 0.0
    %226 = vmatpush1.msra.mxu0 0.0
    %227 = vmatprep.subr.mxu0 0.0
    %228 = vmatpush1.msra.mxu0 0.0
    %229 = vmatprep.subr.mxu0 0.0
    %230 = vmatpush1.msra.mxu0 0.0
    %231 = vmatprep.subr.mxu0 0.0
    %232 = vmatpush1.msra.mxu0 0.0
    %233 = vmatprep.subr.mxu0 0.0
    %234 = vmatpush1.msra.mxu0 0.0
    %235 = vmatprep.subr.mxu0 0.0
    %236 = vmatpush1.msra.mxu0 0.0
    %237 = vmatprep.subr.mxu0 0.0
    %238 = vmatpush1.msra.mxu0 0.0
    %239 = vmatprep.subr.mxu0 0.0
    %240 = vmatpush1.msra.mxu0 0.0
    %241 = vmatprep.subr.mxu0 0.0
    %242 = vmatpush1.msra.mxu0 0.0
    %243 = vmatprep.subr.mxu0 0.0
    %244 = vmatpush1.msra.mxu0 0.0
    %245 = vmatprep.subr.mxu0 0.0
    %246 = vmatpush1.msra.mxu0 0.0
    %247 = vmatprep.subr.mxu0 0.0
    %248 = vmatpush1.msra.mxu0 0.0
    %249 = vmatprep.subr.mxu0 0.0
    %250 = vmatpush1.msra.mxu0 0.0
    %251 = vmatprep.subr.mxu0 0.0
    %252 = vmatpush1.msra.mxu0 0.0
    %253 = vmatprep.subr.mxu0 0.0
    %254 = vmatpush1.msra.mxu0 0.0
    %255 = vmatprep.subr.mxu0 0.0
    %256 = vmatpush1.msra.mxu0 0.0
    %257 = vmatprep.subr.mxu0 0.0
    %258 = vmatpush1.msra.mxu0 0.0
    %259 = vmatprep.subr.mxu0 0.0
    %260 = vmatpush1.msra.mxu0 0.0
    %261 = vmatprep.subr.mxu0 0.0
    %262 = vmatpush1.msra.mxu0 0.0
    %263 = vmatprep.subr.mxu0 0.0
    %264 = vmatpush1.msra.mxu0 0.0
    %265 = vmatprep.subr.mxu0 0.0
    %266 = vmatpush1.msra.mxu0 0.0
    %267 = vmatprep.subr.mxu0 0.0
    %268 = vmatpush1.msra.mxu0 0.0
    %269 = vmatprep.subr.mxu0 0.0
    %270 = vmatpush1.msra.mxu0 0.0
    %271 = vmatprep.subr.mxu0 0.0
    %272 = vmatpush1.msra.mxu0 0.0
    %273 = vmatprep.subr.mxu0 0.0
    %274 = vmatpush1.msra.mxu0 0.0
    %275 = vmatprep.mubr.f32.mxu0 0.0
    %276 = vmatmul.mubr.f32.gmra.mrb[0].mxu0 %v63
    %v277 = vpop.f32.mrb[0].mxu0
    %v278 = vadd.f32 0.0, %v277
    %v279 = vpop.f32.mrb[0].mxu0
    %280 = vdwg.mxu0
    %281 = vst [vmem:[#allocation9 + $0x2] sm:$0x1] %v278
    %s282 = scalar_lea.vmem [#allocation6], 24
    %v283 = vld [vmem:[%s282] sm:$0xff]
    %284 = vmatprep.subr.mxu0 0.0
    %285 = vmatpush1.msra.mxu0 %v283
    %286 = vmatprep.subr.mxu0 0.0
    %287 = vmatpush1.msra.mxu0 0.0
    %288 = vmatprep.subr.mxu0 0.0
    %289 = vmatpush1.msra.mxu0 0.0
    %290 = vmatprep.subr.mxu0 0.0
    %291 = vmatpush1.msra.mxu0 0.0
    %292 = vmatprep.subr.mxu0 0.0
    %293 = vmatpush1.msra.mxu0 0.0
    %294 = vmatprep.subr.mxu0 0.0
    %295 = vmatpush1.msra.mxu0 0.0
    %296 = vmatprep.subr.mxu0 0.0
    %297 = vmatpush1.msra.mxu0 0.0
    %298 = vmatprep.subr.mxu0 0.0
    %299 = vmatpush1.msra.mxu0 0.0
    %300 = vmatprep.subr.mxu0 0.0
    %301 = vmatpush1.msra.mxu0 0.0
    %302 = vmatprep.subr.mxu0 0.0
    %303 = vmatpush1.msra.mxu0 0.0
    %304 = vmatprep.subr.mxu0 0.0
    %305 = vmatpush1.msra.mxu0 0.0
    %306 = vmatprep.subr.mxu0 0.0
    %307 = vmatpush1.msra.mxu0 0.0
    %308 = vmatprep.subr.mxu0 0.0
    %309 = vmatpush1.msra.mxu0 0.0
    %310 = vmatprep.subr.mxu0 0.0
    %311 = vmatpush1.msra.mxu0 0.0
    %312 = vmatprep.subr.mxu0 0.0
    %313 = vmatpush1.msra.mxu0 0.0
    %314 = vmatprep.subr.mxu0 0.0
    %315 = vmatpush1.msra.mxu0 0.0
    %316 = vmatprep.subr.mxu0 0.0
    %317 = vmatpush1.msra.mxu0 0.0
    %318 = vmatprep.subr.mxu0 0.0
    %319 = vmatpush1.msra.mxu0 0.0
    %320 = vmatprep.subr.mxu0 0.0
    %321 = vmatpush1.msra.mxu0 0.0
    %322 = vmatprep.subr.mxu0 0.0
    %323 = vmatpush1.msra.mxu0 0.0
    %324 = vmatprep.subr.mxu0 0.0
    %325 = vmatpush1.msra.mxu0 0.0
    %326 = vmatprep.subr.mxu0 0.0
    %327 = vmatpush1.msra.mxu0 0.0
    %328 = vmatprep.subr.mxu0 0.0
    %329 = vmatpush1.msra.mxu0 0.0
    %330 = vmatprep.subr.mxu0 0.0
    %331 = vmatpush1.msra.mxu0 0.0
    %332 = vmatprep.subr.mxu0 0.0
    %333 = vmatpush1.msra.mxu0 0.0
    %334 = vmatprep.subr.mxu0 0.0
    %335 = vmatpush1.msra.mxu0 0.0
    %336 = vmatprep.subr.mxu0 0.0
    %337 = vmatpush1.msra.mxu0 0.0
    %338 = vmatprep.subr.mxu0 0.0
    %339 = vmatpush1.msra.mxu0 0.0
    %340 = vmatprep.subr.mxu0 0.0
    %341 = vmatpush1.msra.mxu0 0.0
    %342 = vmatprep.subr.mxu0 0.0
    %343 = vmatpush1.msra.mxu0 0.0
    %344 = vmatprep.subr.mxu0 0.0
    %345 = vmatpush1.msra.mxu0 0.0
    %346 = vmatprep.subr.mxu0 0.0
    %347 = vmatpush1.msra.mxu0 0.0
    %348 = vmatprep.mubr.f32.mxu0 0.0
    %349 = vmatmul.mubr.f32.gmra.mrb[0].mxu0 %v63
    %v350 = vpop.f32.mrb[0].mxu0
    %v351 = vadd.f32 0.0, %v350
    %v352 = vpop.f32.mrb[0].mxu0
    %353 = vdwg.mxu0
    %354 = vst [vmem:[#allocation9 + $0x3] sm:$0x1] %v351
    %s355 = scalar_lea.vmem [#allocation6], 32
    %v356 = vld [vmem:[%s355] sm:$0xff]
    %357 = vmatprep.subr.mxu0 0.0
    %358 = vmatpush1.msra.mxu0 %v356
    %359 = vmatprep.subr.mxu0 0.0
    %360 = vmatpush1.msra.mxu0 0.0
    %361 = vmatprep.subr.mxu0 0.0
    %362 = vmatpush1.msra.mxu0 0.0
    %363 = vmatprep.subr.mxu0 0.0
    %364 = vmatpush1.msra.mxu0 0.0
    %365 = vmatprep.subr.mxu0 0.0
    %366 = vmatpush1.msra.mxu0 0.0
    %367 = vmatprep.subr.mxu0 0.0
    %368 = vmatpush1.msra.mxu0 0.0
    %369 = vmatprep.subr.mxu0 0.0
    %370 = vmatpush1.msra.mxu0 0.0
    %371 = vmatprep.subr.mxu0 0.0
    %372 = vmatpush1.msra.mxu0 0.0
    %373 = vmatprep.subr.mxu0 0.0
    %374 = vmatpush1.msra.mxu0 0.0
    %375 = vmatprep.subr.mxu0 0.0
    %376 = vmatpush1.msra.mxu0 0.0
    %377 = vmatprep.subr.mxu0 0.0
    %378 = vmatpush1.msra.mxu0 0.0
    %379 = vmatprep.subr.mxu0 0.0
    %380 = vmatpush1.msra.mxu0 0.0
    %381 = vmatprep.subr.mxu0 0.0
    %382 = vmatpush1.msra.mxu0 0.0
    %383 = vmatprep.subr.mxu0 0.0
    %384 = vmatpush1.msra.mxu0 0.0
    %385 = vmatprep.subr.mxu0 0.0
    %386 = vmatpush1.msra.mxu0 0.0
    %387 = vmatprep.subr.mxu0 0.0
    %388 = vmatpush1.msra.mxu0 0.0
    %389 = vmatprep.subr.mxu0 0.0
    %390 = vmatpush1.msra.mxu0 0.0
    %391 = vmatprep.subr.mxu0 0.0
    %392 = vmatpush1.msra.mxu0 0.0
    %393 = vmatprep.subr.mxu0 0.0
    %394 = vmatpush1.msra.mxu0 0.0
    %395 = vmatprep.subr.mxu0 0.0
    %396 = vmatpush1.msra.mxu0 0.0
    %397 = vmatprep.subr.mxu0 0.0
    %398 = vmatpush1.msra.mxu0 0.0
    %399 = vmatprep.subr.mxu0 0.0
    %400 = vmatpush1.msra.mxu0 0.0
    %401 = vmatprep.subr.mxu0 0.0
    %402 = vmatpush1.msra.mxu0 0.0
    %403 = vmatprep.subr.mxu0 0.0
    %404 = vmatpush1.msra.mxu0 0.0
    %405 = vmatprep.subr.mxu0 0.0
    %406 = vmatpush1.msra.mxu0 0.0
    %407 = vmatprep.subr.mxu0 0.0
    %408 = vmatpush1.msra.mxu0 0.0
    %409 = vmatprep.subr.mxu0 0.0
    %410 = vmatpush1.msra.mxu0 0.0
    %411 = vmatprep.subr.mxu0 0.0
    %412 = vmatpush1.msra.mxu0 0.0
    %413 = vmatprep.subr.mxu0 0.0
    %414 = vmatpush1.msra.mxu0 0.0
    %415 = vmatprep.subr.mxu0 0.0
    %416 = vmatpush1.msra.mxu0 0.0
    %417 = vmatprep.subr.mxu0 0.0
    %418 = vmatpush1.msra.mxu0 0.0
    %419 = vmatprep.subr.mxu0 0.0
    %420 = vmatpush1.msra.mxu0 0.0
    %421 = vmatprep.mubr.f32.mxu0 0.0
    %422 = vmatmul.mubr.f32.gmra.mrb[0].mxu0 %v63
    %v423 = vpop.f32.mrb[0].mxu0
    %v424 = vadd.f32 0.0, %v423
    %v425 = vpop.f32.mrb[0].mxu0
    %426 = vdwg.mxu0
    %427 = vst [vmem:[#allocation9 + $0x4] sm:$0x1] %v424
    %s428 = scalar_lea.vmem [#allocation6], 40
    %v429 = vld [vmem:[%s428] sm:$0xff]
    %430 = vmatprep.subr.mxu0 0.0
    %431 = vmatpush1.msra.mxu0 %v429
    %432 = vmatprep.subr.mxu0 0.0
    %433 = vmatpush1.msra.mxu0 0.0
    %434 = vmatprep.subr.mxu0 0.0
    %435 = vmatpush1.msra.mxu0 0.0
    %436 = vmatprep.subr.mxu0 0.0
    %437 = vmatpush1.msra.mxu0 0.0
    %438 = vmatprep.subr.mxu0 0.0
    %439 = vmatpush1.msra.mxu0 0.0
    %440 = vmatprep.subr.mxu0 0.0
    %441 = vmatpush1.msra.mxu0 0.0
    %442 = vmatprep.subr.mxu0 0.0
    %443 = vmatpush1.msra.mxu0 0.0
    %444 = vmatprep.subr.mxu0 0.0
    %445 = vmatpush1.msra.mxu0 0.0
    %446 = vmatprep.subr.mxu0 0.0
    %447 = vmatpush1.msra.mxu0 0.0
    %448 = vmatprep.subr.mxu0 0.0
    %449 = vmatpush1.msra.mxu0 0.0
    %450 = vmatprep.subr.mxu0 0.0
    %451 = vmatpush1.msra.mxu0 0.0
    %452 = vmatprep.subr.mxu0 0.0
    %453 = vmatpush1.msra.mxu0 0.0
    %454 = vmatprep.subr.mxu0 0.0
    %455 = vmatpush1.msra.mxu0 0.0
    %456 = vmatprep.subr.mxu0 0.0
    %457 = vmatpush1.msra.mxu0 0.0
    %458 = vmatprep.subr.mxu0 0.0
    %459 = vmatpush1.msra.mxu0 0.0
    %460 = vmatprep.subr.mxu0 0.0
    %461 = vmatpush1.msra.mxu0 0.0
    %462 = vmatprep.subr.mxu0 0.0
    %463 = vmatpush1.msra.mxu0 0.0
    %464 = vmatprep.subr.mxu0 0.0
    %465 = vmatpush1.msra.mxu0 0.0
    %466 = vmatprep.subr.mxu0 0.0
    %467 = vmatpush1.msra.mxu0 0.0
    %468 = vmatprep.subr.mxu0 0.0
    %469 = vmatpush1.msra.mxu0 0.0
    %470 = vmatprep.subr.mxu0 0.0
    %471 = vmatpush1.msra.mxu0 0.0
    %472 = vmatprep.subr.mxu0 0.0
    %473 = vmatpush1.msra.mxu0 0.0
    %474 = vmatprep.subr.mxu0 0.0
    %475 = vmatpush1.msra.mxu0 0.0
    %476 = vmatprep.subr.mxu0 0.0
    %477 = vmatpush1.msra.mxu0 0.0
    %478 = vmatprep.subr.mxu0 0.0
    %479 = vmatpush1.msra.mxu0 0.0
    %480 = vmatprep.subr.mxu0 0.0
    %481 = vmatpush1.msra.mxu0 0.0
    %482 = vmatprep.subr.mxu0 0.0
    %483 = vmatpush1.msra.mxu0 0.0
    %484 = vmatprep.subr.mxu0 0.0
    %485 = vmatpush1.msra.mxu0 0.0
    %486 = vmatprep.subr.mxu0 0.0
    %487 = vmatpush1.msra.mxu0 0.0
    %488 = vmatprep.subr.mxu0 0.0
    %489 = vmatpush1.msra.mxu0 0.0
    %490 = vmatprep.subr.mxu0 0.0
    %491 = vmatpush1.msra.mxu0 0.0
    %492 = vmatprep.subr.mxu0 0.0
    %493 = vmatpush1.msra.mxu0 0.0
    %494 = vmatprep.mubr.f32.mxu0 0.0
    %495 = vmatmul.mubr.f32.gmra.mrb[0].mxu0 %v63
    %v496 = vpop.f32.mrb[0].mxu0
    %v497 = vadd.f32 0.0, %v496
    %v498 = vpop.f32.mrb[0].mxu0
    %499 = vdwg.mxu0
    %500 = vst [vmem:[#allocation9 + $0x5] sm:$0x1] %v497
    %s501 = scalar_lea.vmem [#allocation6], 48
    %v502 = vld [vmem:[%s501] sm:$0xff]
    %503 = vmatprep.subr.mxu0 0.0
    %504 = vmatpush1.msra.mxu0 %v502
    %505 = vmatprep.subr.mxu0 0.0
    %506 = vmatpush1.msra.mxu0 0.0
    %507 = vmatprep.subr.mxu0 0.0
    %508 = vmatpush1.msra.mxu0 0.0
    %509 = vmatprep.subr.mxu0 0.0
    %510 = vmatpush1.msra.mxu0 0.0
    %511 = vmatprep.subr.mxu0 0.0
    %512 = vmatpush1.msra.mxu0 0.0
    %513 = vmatprep.subr.mxu0 0.0
    %514 = vmatpush1.msra.mxu0 0.0
    %515 = vmatprep.subr.mxu0 0.0
    %516 = vmatpush1.msra.mxu0 0.0
    %517 = vmatprep.subr.mxu0 0.0
    %518 = vmatpush1.msra.mxu0 0.0
    %519 = vmatprep.subr.mxu0 0.0
    %520 = vmatpush1.msra.mxu0 0.0
    %521 = vmatprep.subr.mxu0 0.0
    %522 = vmatpush1.msra.mxu0 0.0
    %523 = vmatprep.subr.mxu0 0.0
    %524 = vmatpush1.msra.mxu0 0.0
    %525 = vmatprep.subr.mxu0 0.0
    %526 = vmatpush1.msra.mxu0 0.0
    %527 = vmatprep.subr.mxu0 0.0
    %528 = vmatpush1.msra.mxu0 0.0
    %529 = vmatprep.subr.mxu0 0.0
    %530 = vmatpush1.msra.mxu0 0.0
    %531 = vmatprep.subr.mxu0 0.0
    %532 = vmatpush1.msra.mxu0 0.0
    %533 = vmatprep.subr.mxu0 0.0
    %534 = vmatpush1.msra.mxu0 0.0
    %535 = vmatprep.subr.mxu0 0.0
    %536 = vmatpush1.msra.mxu0 0.0
    %537 = vmatprep.subr.mxu0 0.0
    %538 = vmatpush1.msra.mxu0 0.0
    %539 = vmatprep.subr.mxu0 0.0
    %540 = vmatpush1.msra.mxu0 0.0
    %541 = vmatprep.subr.mxu0 0.0
    %542 = vmatpush1.msra.mxu0 0.0
    %543 = vmatprep.subr.mxu0 0.0
    %544 = vmatpush1.msra.mxu0 0.0
    %545 = vmatprep.subr.mxu0 0.0
    %546 = vmatpush1.msra.mxu0 0.0
    %547 = vmatprep.subr.mxu0 0.0
    %548 = vmatpush1.msra.mxu0 0.0
    %549 = vmatprep.subr.mxu0 0.0
    %550 = vmatpush1.msra.mxu0 0.0
    %551 = vmatprep.subr.mxu0 0.0
    %552 = vmatpush1.msra.mxu0 0.0
    %553 = vmatprep.subr.mxu0 0.0
    %554 = vmatpush1.msra.mxu0 0.0
    %555 = vmatprep.subr.mxu0 0.0
    %556 = vmatpush1.msra.mxu0 0.0
    %557 = vmatprep.subr.mxu0 0.0
    %558 = vmatpush1.msra.mxu0 0.0
    %559 = vmatprep.subr.mxu0 0.0
    %560 = vmatpush1.msra.mxu0 0.0
    %561 = vmatprep.subr.mxu0 0.0
    %562 = vmatpush1.msra.mxu0 0.0
    %563 = vmatprep.subr.mxu0 0.0
    %564 = vmatpush1.msra.mxu0 0.0
    %565 = vmatprep.subr.mxu0 0.0
    %566 = vmatpush1.msra.mxu0 0.0
    %567 = vmatprep.mubr.f32.mxu0 0.0
    %568 = vmatmul.mubr.f32.gmra.mrb[0].mxu0 %v63
    %v569 = vpop.f32.mrb[0].mxu0
    %v570 = vadd.f32 0.0, %v569
    %v571 = vpop.f32.mrb[0].mxu0
    %572 = vdwg.mxu0
    %573 = vst [vmem:[#allocation9 + $0x6] sm:$0x1] %v570
    %s574 = scalar_lea.vmem [#allocation6], 56
    %v575 = vld [vmem:[%s574] sm:$0xff]
    %576 = vmatprep.subr.mxu0 0.0
    %577 = vmatpush1.msra.mxu0 %v575
    %578 = vmatprep.subr.mxu0 0.0
    %579 = vmatpush1.msra.mxu0 0.0
    %580 = vmatprep.subr.mxu0 0.0
    %581 = vmatpush1.msra.mxu0 0.0
    %582 = vmatprep.subr.mxu0 0.0
    %583 = vmatpush1.msra.mxu0 0.0
    %584 = vmatprep.subr.mxu0 0.0
    %585 = vmatpush1.msra.mxu0 0.0
    %586 = vmatprep.subr.mxu0 0.0
    %587 = vmatpush1.msra.mxu0 0.0
    %588 = vmatprep.subr.mxu0 0.0
    %589 = vmatpush1.msra.mxu0 0.0
    %590 = vmatprep.subr.mxu0 0.0
    %591 = vmatpush1.msra.mxu0 0.0
    %592 = vmatprep.subr.mxu0 0.0
    %593 = vmatpush1.msra.mxu0 0.0
    %594 = vmatprep.subr.mxu0 0.0
    %595 = vmatpush1.msra.mxu0 0.0
    %596 = vmatprep.subr.mxu0 0.0
    %597 = vmatpush1.msra.mxu0 0.0
    %598 = vmatprep.subr.mxu0 0.0
    %599 = vmatpush1.msra.mxu0 0.0
    %600 = vmatprep.subr.mxu0 0.0
    %601 = vmatpush1.msra.mxu0 0.0
    %602 = vmatprep.subr.mxu0 0.0
    %603 = vmatpush1.msra.mxu0 0.0
    %604 = vmatprep.subr.mxu0 0.0
    %605 = vmatpush1.msra.mxu0 0.0
    %606 = vmatprep.subr.mxu0 0.0
    %607 = vmatpush1.msra.mxu0 0.0
    %608 = vmatprep.subr.mxu0 0.0
    %609 = vmatpush1.msra.mxu0 0.0
    %610 = vmatprep.subr.mxu0 0.0
    %611 = vmatpush1.msra.mxu0 0.0
    %612 = vmatprep.subr.mxu0 0.0
    %613 = vmatpush1.msra.mxu0 0.0
    %614 = vmatprep.subr.mxu0 0.0
    %615 = vmatpush1.msra.mxu0 0.0
    %616 = vmatprep.subr.mxu0 0.0
    %617 = vmatpush1.msra.mxu0 0.0
    %618 = vmatprep.subr.mxu0 0.0
    %619 = vmatpush1.msra.mxu0 0.0
    %620 = vmatprep.subr.mxu0 0.0
    %621 = vmatpush1.msra.mxu0 0.0
    %622 = vmatprep.subr.mxu0 0.0
    %623 = vmatpush1.msra.mxu0 0.0
    %624 = vmatprep.subr.mxu0 0.0
    %625 = vmatpush1.msra.mxu0 0.0
    %626 = vmatprep.subr.mxu0 0.0
    %627 = vmatpush1.msra.mxu0 0.0
    %628 = vmatprep.subr.mxu0 0.0
    %629 = vmatpush1.msra.mxu0 0.0
    %630 = vmatprep.subr.mxu0 0.0
    %631 = vmatpush1.msra.mxu0 0.0
    %632 = vmatprep.subr.mxu0 0.0
    %633 = vmatpush1.msra.mxu0 0.0
    %634 = vmatprep.subr.mxu0 0.0
    %635 = vmatpush1.msra.mxu0 0.0
    %636 = vmatprep.subr.mxu0 0.0
    %637 = vmatpush1.msra.mxu0 0.0
    %638 = vmatprep.subr.mxu0 0.0
    %639 = vmatpush1.msra.mxu0 0.0
    %640 = vmatprep.mubr.f32.mxu0 0.0
    %641 = vmatmul.mubr.f32.gmra.mrb[0].mxu0 %v63
    %v642 = vpop.f32.mrb[0].mxu0
    %v643 = vadd.f32 0.0, %v642
    %v644 = vpop.f32.mrb[0].mxu0
    %645 = vdwg.mxu0
    %646 = vst [vmem:[#allocation9 + $0x7] sm:$0x1] %v643
    %v647 = vld [vmem:[#allocation8] sm:$0xff]
    %648 = vmatprep.subr.mxu0 0.0
    %649 = vmatpush1.msra.mxu0 %v647
    %650 = vmatprep.subr.mxu0 0.0
    %651 = vmatpush1.msra.mxu0 0.0
    %652 = vmatprep.subr.mxu0 0.0
    %653 = vmatpush1.msra.mxu0 0.0
    %654 = vmatprep.subr.mxu0 0.0
    %655 = vmatpush1.msra.mxu0 0.0
    %656 = vmatprep.subr.mxu0 0.0
    %657 = vmatpush1.msra.mxu0 0.0
    %658 = vmatprep.subr.mxu0 0.0
    %659 = vmatpush1.msra.mxu0 0.0
    %660 = vmatprep.subr.mxu0 0.0
    %661 = vmatpush1.msra.mxu0 0.0
    %662 = vmatprep.subr.mxu0 0.0
    %663 = vmatpush1.msra.mxu0 0.0
    %664 = vmatprep.subr.mxu0 0.0
    %665 = vmatpush1.msra.mxu0 0.0
    %666 = vmatprep.subr.mxu0 0.0
    %667 = vmatpush1.msra.mxu0 0.0
    %668 = vmatprep.subr.mxu0 0.0
    %669 = vmatpush1.msra.mxu0 0.0
    %670 = vmatprep.subr.mxu0 0.0
    %671 = vmatpush1.msra.mxu0 0.0
    %672 = vmatprep.subr.mxu0 0.0
    %673 = vmatpush1.msra.mxu0 0.0
    %674 = vmatprep.subr.mxu0 0.0
    %675 = vmatpush1.msra.mxu0 0.0
    %676 = vmatprep.subr.mxu0 0.0
    %677 = vmatpush1.msra.mxu0 0.0
    %678 = vmatprep.subr.mxu0 0.0
    %679 = vmatpush1.msra.mxu0 0.0
    %680 = vmatprep.subr.mxu0 0.0
    %681 = vmatpush1.msra.mxu0 0.0
    %682 = vmatprep.subr.mxu0 0.0
    %683 = vmatpush1.msra.mxu0 0.0
    %684 = vmatprep.subr.mxu0 0.0
    %685 = vmatpush1.msra.mxu0 0.0
    %686 = vmatprep.subr.mxu0 0.0
    %687 = vmatpush1.msra.mxu0 0.0
    %688 = vmatprep.subr.mxu0 0.0
    %689 = vmatpush1.msra.mxu0 0.0
    %690 = vmatprep.subr.mxu0 0.0
    %691 = vmatpush1.msra.mxu0 0.0
    %692 = vmatprep.subr.mxu0 0.0
    %693 = vmatpush1.msra.mxu0 0.0
    %694 = vmatprep.subr.mxu0 0.0
    %695 = vmatpush1.msra.mxu0 0.0
    %696 = vmatprep.subr.mxu0 0.0
    %697 = vmatpush1.msra.mxu0 0.0
    %698 = vmatprep.subr.mxu0 0.0
    %699 = vmatpush1.msra.mxu0 0.0
    %700 = vmatprep.subr.mxu0 0.0
    %701 = vmatpush1.msra.mxu0 0.0
    %702 = vmatprep.subr.mxu0 0.0
    %703 = vmatpush1.msra.mxu0 0.0
    %704 = vmatprep.subr.mxu0 0.0
    %705 = vmatpush1.msra.mxu0 0.0
    %706 = vmatprep.subr.mxu0 0.0
    %707 = vmatpush1.msra.mxu0 0.0
    %708 = vmatprep.subr.mxu0 0.0
    %709 = vmatpush1.msra.mxu0 0.0
    %710 = vmatprep.subr.mxu0 0.0
    %711 = vmatpush1.msra.mxu0 0.0
    %712 = vmatprep.mubr.f32.mxu0 0.0
    %713 = vmatmul.mubr.f32.gmra.mrb[0].mxu0 %v63
    %v714 = vpop.f32.mrb[0].mxu0
    %v715 = vadd.f32 0.0, %v714
    %v716 = vpop.f32.mrb[0].mxu0
    %717 = vdwg.mxu0
    %vm718 = vcmask 57344
    %719 = vst.msk [vmem:[#allocation2] sm:$0x1] %vm718, %v715
    // Predicated region
    $region30: #{tpu_custom_call.1} parent=1 // pred_check
      _
    $region31: #{tpu_custom_call.1} parent=1 // pred_check_branch
      %721 = sbr.rel (0) target = $region33
    $region32: #{tpu_custom_call.1} parent=1 // pred_region
      %s723 = ssub.s32 128, 128
      %724 = vsyncadd [#allocation5], %s723
      %s726 = sshll.u32 [#allocation9], 4
      %s727 = int_to_ptr.vmem [resolvable:$true] %s726
      %729 = dma.vmem_to_hbm [thread:$0]  %s727, 128, %s3, [#allocation5]
    $region33: #{tpu_custom_call.1} parent=1 // pred_fallthru
      _
    // Predicated region
    $region34: #{tpu_custom_call.1} parent=1 // pred_check
      _
    $region35: #{tpu_custom_call.1} parent=1 // pred_check_branch
      %731 = sbr.rel (0) target = $region37
    $region36: #{tpu_custom_call.1} parent=1 // pred_region
      %732 = dma.done [#allocation5], 128
    $region37: #{tpu_custom_call.1} parent=1 // pred_fallthru
      _
    %733 = vsyncpa [#allocation4], 1
    %734 = vsyncpa [#allocation7], 1
    %735 = vsyncpa [#allocation5], 1

</llo_original>
